<compile_context>
chip_gen: v5e
topology: v5e:2x2
jax: 0.10.0
libtpu: 0.0.40
codegen_flags: <defaults>
</compile_context>

<pallas_src>
import functools

import jax
import jax.numpy as jnp
from jax.experimental import pallas as pl
from jax.experimental.pallas import tpu as pltpu


def _round_up(x, m):
    return ((x + m - 1) // m) * m


# Contract the last dim (K) of both operands: (E, K) x (TL, K) -> (E, TL).
# Same "trans-B" dimension numbers as the flash-attention q @ k.T pattern.
_TRANS_B_DIMS = (((1,), (1,)), ((), ()))


# ---------------------------------------------------------------------------
# Pallas kernel: one (n, l-tile) step of   out[n, :, l:l+TL] = W @ patches^T + b
# ---------------------------------------------------------------------------
def _proj_kernel(x_ref, w_ref, b_ref, o_ref):
    # x_ref: (1, TL, K) bf16   w_ref: (E, K) bf16   b_ref: (E, 1) f32
    # o_ref: (1, E, TL) f32
    acc = jax.lax.dot_general(
        w_ref[...], x_ref[0], _TRANS_B_DIMS,
        preferred_element_type=jnp.float32)            # (E, TL), single MXU pass
    o_ref[0] = (acc + b_ref[...]).astype(o_ref.dtype)


def _tile_footprint_bytes(tl, K, E):
    """Double-buffered in/out tiles + resident weights/bias (upper bound)."""
    k_lanes = _round_up(K, 128)
    e_sub = _round_up(E, 8)
    x_blk = tl * k_lanes * 2              # bf16 patch tile
    o_blk = e_sub * tl * 4                # f32 output tile
    w_bytes = _round_up(E, 16) * k_lanes * 2
    b_bytes = e_sub * 128 * 4
    return 2 * x_blk + 2 * o_blk + w_bytes + b_bytes


def _choose_tl(N, L, K, E, tl):
    """Patch-row tile (the output lane dim): multiple of 128 or equal to L."""
    if tl is not None:
        tl = max(1, min(int(tl), L))
        if tl < L and tl % 128 != 0:
            tl = max(128, (tl // 128) * 128)
        return tl
    if L <= 256:
        tl = L
    else:
        tl = min(2048, (L // 128) * 128)
        # Keep the double-buffered footprint under ~48 MiB (v7x VMEM is 64 MiB).
        while tl > 128 and _tile_footprint_bytes(tl, K, E) > (48 << 20):
            tl -= 128
    # v7x has 2 TensorCores: try to give the grid at least 2 steps.
    if N * pl.cdiv(L, tl) < 2 and L > 128:
        tl = max(128, _round_up((L + 1) // 2, 128))
    return tl


def _pallas_proj(patches, w, b2d, tl):
    """patches: (N, L, K) bf16, w: (E, K) bf16, b2d: (E, 1) f32 -> (N, E, L) f32."""
    N, L, K = patches.shape
    E = w.shape[0]
    nl = pl.cdiv(L, tl)

    cost = pl.CostEstimate(
        flops=2 * N * L * K * E,
        transcendentals=0,
        bytes_accessed=2 * N * L * K + 2 * E * K + 4 * E + 4 * N * E * L,
    )
    footprint = _tile_footprint_bytes(tl, K, E)
    vmem_limit = int(min(max(footprint + footprint // 4 + (2 << 20), 16 << 20),
                         60 << 20))

    return pl.pallas_call(
        _proj_kernel,
        out_shape=jax.ShapeDtypeStruct((N, E, L), jnp.float32),
        grid_spec=pltpu.PrefetchScalarGridSpec(
            num_scalar_prefetch=0,
            grid=(N, nl),
            in_specs=[
                # Patch rows: new tile each step (auto double-buffered).
                pl.BlockSpec((1, tl, K), lambda n, l: (n, l, 0)),
                # Weights: resident across the whole grid.
                pl.BlockSpec((E, K), lambda n, l: (0, 0)),
                # Bias: resident (E, 1) block.
                pl.BlockSpec((E, 1), lambda n, l: (0, 0)),
            ],
            out_specs=pl.BlockSpec((1, E, tl), lambda n, l: (n, 0, l)),
        ),
        compiler_params=pltpu.CompilerParams(
            dimension_semantics=("parallel", "parallel"),
            vmem_limit_bytes=vmem_limit,
        ),
        cost_estimate=cost,
    )(patches, w, b2d)


# ---------------------------------------------------------------------------
# PatchEmbed forward (norm_layer=None, matching the module default)
# ---------------------------------------------------------------------------
def patch_embed_forward(x, weight, bias, patch_size, tl=None):
    """x: [N, C, H, W, T]; weight: [E, C, p0, p1, p2] (PyTorch Conv3d layout);
    bias: [E].  Returns [N, E, Hp, Wp, Tp] float32 (module output layout)."""
    p0, p1, p2 = patch_size
    N, C, H, W, T = x.shape

    # Zero-pad spatial dims up to multiples of patch_size (same as F.pad).
    pad_h = (-H) % p0
    pad_w = (-W) % p1
    pad_t = (-T) % p2
    if pad_h or pad_w or pad_t:
        x = jnp.pad(x, ((0, 0), (0, 0), (0, pad_h), (0, pad_w), (0, pad_t)))
    Hp, Wp, Tp = (H + pad_h) // p0, (W + pad_w) // p1, (T + pad_t) // p2
    L = Hp * Wp * Tp
    K = C * p0 * p1 * p2
    E = weight.shape[0]

    # Patch extraction (XLA glue): [N, L, K] with K ordered (C, p0, p1, p2) to
    # match the Conv3d weight layout (no K padding).  The bf16 cast is fused
    # into the same copy, halving the materialized patch bytes.
    # TODO(synk): fuse this strided extraction into the kernel (8-D BlockSpec or
    # manual DMA) to save the remaining input-side HBM round trip over x.
    xr = x.reshape(N, C, Hp, p0, Wp, p1, Tp, p2)
    patches = (jnp.transpose(xr, (0, 2, 4, 6, 1, 3, 5, 7))
               .reshape(N, L, K)
               .astype(jnp.bfloat16))

    w2d = weight.reshape(E, K).astype(jnp.bfloat16)     # (E, K)
    b2d = bias.astype(jnp.float32).reshape(E, 1)        # (E, 1)

    tl = _choose_tl(N, L, K, E, tl)
    out = _pallas_proj(patches, w2d, b2d, tl)           # (N, E, L) f32

    # Free reshape into the module's [N, E, Hp, Wp, Tp] layout: no transpose and
    # no slice (E is un-padded; the partial last L tile was masked by Pallas).
    return out.reshape(N, E, Hp, Wp, Tp)
    # TODO(synk): optional norm_layer (LayerNorm over E) not implemented; the
    # module default is norm_layer=None.


# ---------------------------------------------------------------------------
# Pure-JAX f32 reference (HIGHEST precision) for the correctness check
# ---------------------------------------------------------------------------
def _reference(x, weight, bias, patch_size):
    p0, p1, p2 = patch_size
    N, C, H, W, T = x.shape
    pad_h, pad_w, pad_t = (-H) % p0, (-W) % p1, (-T) % p2
    x = jnp.pad(x, ((0, 0), (0, 0), (0, pad_h), (0, pad_w), (0, pad_t)))
    Hp, Wp, Tp = (H + pad_h) // p0, (W + pad_w) // p1, (T + pad_t) // p2
    xr = x.reshape(N, C, Hp, p0, Wp, p1, Tp, p2)
    out = jnp.einsum('ncxaybzd,ecabd->nexyz', xr, weight,
                     precision=jax.lax.Precision.HIGHEST)
    return out + bias[None, :, None, None, None]


if __name__ == "__main__":
    def _run_case(N, C, H, W, T, E, patch_size, tl=None, seed=0):
        key = jax.random.PRNGKey(seed)
        kx, kw, kb = jax.random.split(key, 3)
        x = jax.random.normal(kx, (N, C, H, W, T), dtype=jnp.float32)
        weight = 0.02 * jax.random.normal(
            kw, (E, C) + patch_size, dtype=jnp.float32)
        bias = 0.01 * jax.random.normal(kb, (E,), dtype=jnp.float32)

        fwd = jax.jit(functools.partial(
            patch_embed_forward, patch_size=patch_size, tl=tl))
        out = jax.block_until_ready(fwd(x, weight, bias))
        ref = _reference(x, weight, bias, patch_size)

        p0, p1, p2 = patch_size
        Hp, Wp, Tp = -(-H // p0), -(-W // p1), -(-T // p2)
        assert out.shape == (N, E, Hp, Wp, Tp), out.shape
        # bf16 MXU inputs vs f32 HIGHEST reference -> intentionally loose tol.
        assert jnp.allclose(out, ref, atol=2e-2, rtol=2e-2), "mismatch vs reference"

    # Case A: exercises the T-padding branch (T=6 -> pad to 8); grid = (2, 1)
    # with tl = L = 32 (full-dim lane block, E=32 un-padded).
    _run_case(2, 3, 16, 16, 6, 32, (4, 4, 4), seed=0)

    # Case B: multi-step L grid with a partial last lane block
    # (L = 12*12*2 = 288, tl = 128 -> 3 steps, last block masked on writeback).
    _run_case(1, 3, 48, 48, 8, 96, (4, 4, 4), tl=128, seed=1)

    print("KERNEL_OK")
</pallas_src>

<mosaic_0001>
module attributes {stable_mosaic.version = 11 : i64} {
  func.func @_proj_kernel(%arg0: i32, %arg1: i32, %arg2: memref<1x32x192xbf16, #tpu.memory_space<vmem>>, %arg3: memref<32x192xbf16, #tpu.memory_space<vmem>>, %arg4: memref<32x1xf32, #tpu.memory_space<vmem>>, %arg5: memref<1x32x32xf32, #tpu.memory_space<vmem>>) attributes {dimension_semantics = [#tpu.dimension_semantics<parallel>, #tpu.dimension_semantics<parallel>], iteration_bounds = array<i64: 2, 1>, scalar_prefetch = 0 : i64, scratch_operands = 0 : i64, tpu.core_type = #tpu.core_type<tc>, window_params = [{transform_indices = @transform_0, window_bounds = array<i64: 1, 32, 192>}, {pipeline_mode = #tpu.pipeline_mode<synchronous>, transform_indices = @transform_1, window_bounds = array<i64: 32, 192>}, {pipeline_mode = #tpu.pipeline_mode<synchronous>, transform_indices = @transform_2, window_bounds = array<i64: 32, 1>}, {transform_indices = @transform_3, window_bounds = array<i64: 1, 32, 32>}]} {
    %c0 = arith.constant 0 : index
    %c0_0 = arith.constant 0 : index
    %0 = vector.load %arg3[%c0, %c0_0] : memref<32x192xbf16, #tpu.memory_space<vmem>>, vector<32x192xbf16>
    %c0_1 = arith.constant 0 : index
    %c0_2 = arith.constant 0 : index
    %c0_3 = arith.constant 0 : index
    %1 = vector.load %arg2[%c0_1, %c0_2, %c0_3] : memref<1x32x192xbf16, #tpu.memory_space<vmem>>, vector<1x32x192xbf16>
    %2 = vector.shape_cast %1 : vector<1x32x192xbf16> to vector<32x192xbf16>
    %cst = arith.constant dense<0.000000e+00> : vector<32x32xf32>
    %3 = tpu.matmul %0, %2, %cst {dimension_numbers = #tpu.dot_dimension_numbers<[1], [1], [0], [0], [0, 0, 1, 0], [], []>} : vector<32x192xbf16>, vector<32x192xbf16>, vector<32x32xf32> -> vector<32x32xf32>
    %c0_4 = arith.constant 0 : index
    %c0_5 = arith.constant 0 : index
    %4 = vector.load %arg4[%c0_4, %c0_5] : memref<32x1xf32, #tpu.memory_space<vmem>>, vector<32x1xf32>
    %5 = vector.broadcast %4 : vector<32x1xf32> to vector<32x32xf32>
    %6 = arith.addf %3, %5 : vector<32x32xf32>
    %c0_6 = arith.constant 0 : index
    %c0_7 = arith.constant 0 : index
    %c0_8 = arith.constant 0 : index
    %7 = vector.load %arg5[%c0_6, %c0_7, %c0_8] : memref<1x32x32xf32, #tpu.memory_space<vmem>>, vector<1x32x32xf32>
    %8 = vector.shape_cast %7 : vector<1x32x32xf32> to vector<32x32xf32>
    %9 = vector.shape_cast %6 : vector<32x32xf32> to vector<1x32x32xf32>
    tpu.vector_store %arg5[%c0_6, %c0_7, %c0_8], %9 {strides = array<i32>} : memref<1x32x32xf32, #tpu.memory_space<vmem>>, vector<1x32x32xf32>,
    return
  }
  func.func @transform_0(%arg0: i32, %arg1: i32) -> (i32, i32, i32) {
    %c0_i32 = arith.constant 0 : i32
    %c0_i32_0 = arith.constant 0 : i32
    return %arg0, %arg1, %c0_i32 : i32, i32, i32
  }
  func.func @transform_1(%arg0: i32, %arg1: i32) -> (i32, i32) {
    %c0_i32 = arith.constant 0 : i32
    %c0_i32_0 = arith.constant 0 : i32
    %c0_i32_1 = arith.constant 0 : i32
    return %c0_i32, %c0_i32_0 : i32, i32
  }
  func.func @transform_2(%arg0: i32, %arg1: i32) -> (i32, i32) {
    %c0_i32 = arith.constant 0 : i32
    %c0_i32_0 = arith.constant 0 : i32
    %c0_i32_1 = arith.constant 0 : i32
    return %c0_i32, %c0_i32_0 : i32, i32
  }
  func.func @transform_3(%arg0: i32, %arg1: i32) -> (i32, i32, i32) {
    %c0_i32 = arith.constant 0 : i32
    %c0_i32_0 = arith.constant 0 : i32
    return %arg0, %c0_i32, %arg1 : i32, i32, i32
  }
}

</mosaic_0001>

<llo_original>
// kernel: patch_embed_forward.1
$region0: #{patch_embed_forward.1}
  #allocation0 [shape = 'u32[]', space=smem, size = 0x4, offset = 0x4, fixed_abs, tag = 'smem constant byte address 0x4 - core index']
  #allocation1 [shape = 'u32[72,128]{1,0:T(1,128)}', space=vmem, size = 0x9000, scoped, tag = 'internal scratch']
  %s0 = inlined_call_operand.vmem [shape: bf16[2,32,192], index: 0, kind: input, shape index: {}]
  %s1 = inlined_call_operand.vmem [shape: bf16[32,192], index: 1, kind: input, shape index: {}]
  %s2 = inlined_call_operand.vmem [shape: f32[32,1], index: 2, kind: input, shape index: {}]
  %s3 = inlined_call_operand.vmem [shape: f32[2,32,32], index: 3, kind: output, shape index: {}]
  %s4 = sld [smem:[#allocation0]]
  $region45: #{patch_embed_forward.1} parent=0
    _
  %s6 = ssub.s32 1, %s4
  %s7 = scalar_select 0, %s6, %s4
  loop: start=0, step=1, limit=4
  $region2: #{patch_embed_forward.1} parent=0 // loop_pre_header
    _
  $region3: #{patch_embed_forward.1} parent=0 // loop_header
    %s9 = sphi 0, %s13
    %p10 = scmp.ge.s32.totalorder %s9, 4
    %s16 = sphi 0, %s28
    %s17 = sphi 0, %s24
    %s18 = sphi 0, %s16
    %s19 = sphi 0, %s17
    %s20 = sphi 0, %s18
    %s21 = sphi 0, %s19
    %s33 = sphi 0, %s35
    %s36 = sphi 0, %s33
    %s37 = sphi 0, %s36
    %s53 = sphi 0, %s37
    %s57 = sphi 0, %s57
    %s59 = sphi 0, %s57
    %s60 = sphi 0, %s59
    %s74 = sphi 0, %s60
    %s78 = sphi 0, %s78
    %s80 = sphi 0, %s78
    %s81 = sphi 0, %s80
    %s95 = sphi 0, %s81
    %s103 = sphi 0, %s105
    %s106 = sphi 0, %s103
    %s107 = sphi 0, %s106
    %s123 = sphi 0, %s107
  $region4: #{patch_embed_forward.1} parent=0 // loop_header_branch
    %12 = sbr.rel (%p10) target = $region8
  $region5: #{patch_embed_forward.1} parent=0 // loop_body
    %s14 = ssub.s32 %s9, 1
    %s15 = ssub.s32 %s9, 2
    %s22 = sadd.s32 1, %s17
    %p23 = scmp.ge.s32.totalorder %s22, 1
    %s24 = scalar_select %p23, 0, %s22
    %s25 = sadd.s32 1, %s16
    %s26 = scalar_select %p23, %s25, %s16
    %p27 = scmp.ge.s32.totalorder %s26, 2
    %s28 = scalar_select %p27, 0, %s26
    %s29 = ssub.s32 %s16, %s28
    %s30 = ssub.s32 %s17, %s24
    %s31 = sor.u32 %s29, %s30
    %p32 = scmp.eq.s32.totalorder %s31, 0
    %s34 = sadd.s32 %s33, 1
    %s35 = scalar_select %p32, %s33, %s34
    %p38 = pneg %p32
    %p39 = scmp.eq.s32.totalorder %s9, 1
    %p40 = por %p38, %p39
    %p41 = scmp.ne.s32.totalorder %s33, %s36
    %p42 = scmp.eq.s32.totalorder %s9, 0
    %p43 = por %p41, %p42
    %p44 = scmp.ne.s32.totalorder %s33, %s36
    %p45 = scmp.eq.s32.totalorder %s14, 1
    %p46 = por %p44, %p45
    %p47 = scmp.ne.s32.totalorder %s36, %s37
    %p48 = scmp.eq.s32.totalorder %s14, 0
    %p49 = por %p47, %p48
    %p50 = scmp.ne.s32.totalorder %s36, %s37
    %p51 = scmp.eq.s32.totalorder %s15, 1
    %p52 = por %p50, %p51
    %p54 = scmp.ne.s32.totalorder %s37, %s53
    %p55 = scmp.eq.s32.totalorder %s15, 0
    %p56 = por %p54, %p55
    %s58 = sadd.s32 %s57, 1
    %p61 = scmp.eq.s32.totalorder %s9, 1
    %p62 = scmp.ne.s32.totalorder %s57, %s59
    %p63 = scmp.eq.s32.totalorder %s9, 0
    %p64 = por %p62, %p63
    %p65 = scmp.ne.s32.totalorder %s57, %s59
    %p66 = scmp.eq.s32.totalorder %s14, 1
    %p67 = por %p65, %p66
    %p68 = scmp.ne.s32.totalorder %s59, %s60
    %p69 = scmp.eq.s32.totalorder %s14, 0
    %p70 = por %p68, %p69
    %p71 = scmp.ne.s32.totalorder %s59, %s60
    %p72 = scmp.eq.s32.totalorder %s15, 1
    %p73 = por %p71, %p72
    %p75 = scmp.ne.s32.totalorder %s60, %s74
    %p76 = scmp.eq.s32.totalorder %s15, 0
    %p77 = por %p75, %p76
    %s79 = sadd.s32 %s78, 1
    %p82 = scmp.eq.s32.totalorder %s9, 1
    %p83 = scmp.ne.s32.totalorder %s78, %s80
    %p84 = scmp.eq.s32.totalorder %s9, 0
    %p85 = por %p83, %p84
    %p86 = scmp.ne.s32.totalorder %s78, %s80
    %p87 = scmp.eq.s32.totalorder %s14, 1
    %p88 = por %p86, %p87
    %p89 = scmp.ne.s32.totalorder %s80, %s81
    %p90 = scmp.eq.s32.totalorder %s14, 0
    %p91 = por %p89, %p90
    %p92 = scmp.ne.s32.totalorder %s80, %s81
    %p93 = scmp.eq.s32.totalorder %s15, 1
    %p94 = por %p92, %p93
    %p96 = scmp.ne.s32.totalorder %s81, %s95
    %p97 = scmp.eq.s32.totalorder %s15, 0
    %p98 = por %p96, %p97
    %s99 = ssub.s32 %s16, %s28
    %s100 = ssub.s32 %s17, %s24
    %s101 = sor.u32 %s99, %s100
    %p102 = scmp.eq.s32.totalorder %s101, 0
    %s104 = sadd.s32 %s103, 1
    %s105 = scalar_select %p102, %s103, %s104
    %p108 = pneg %p102
    %p109 = scmp.eq.s32.totalorder %s9, 1
    %p110 = por %p108, %p109
    %p111 = scmp.ne.s32.totalorder %s103, %s106
    %p112 = scmp.eq.s32.totalorder %s9, 0
    %p113 = por %p111, %p112
    %p114 = scmp.ne.s32.totalorder %s103, %s106
    %p115 = scmp.eq.s32.totalorder %s14, 1
    %p116 = por %p114, %p115
    %p117 = scmp.ne.s32.totalorder %s106, %s107
    %p118 = scmp.eq.s32.totalorder %s14, 0
    %p119 = por %p117, %p118
    %p120 = scmp.ne.s32.totalorder %s106, %s107
    %p121 = scmp.eq.s32.totalorder %s15, 1
    %p122 = por %p120, %p121
    %p124 = scmp.ne.s32.totalorder %s107, %s123
    %p125 = scmp.eq.s32.totalorder %s15, 0
    %p126 = por %p124, %p125
    %p127 = scmp.le.s32.totalorder 1, %s9
    %p128 = scmp.lt.s32.totalorder %s9, 3
    %p129 = pnand %p127, %p128
    %p130 = pneg %p129
    // Predicated region
    $region9: #{patch_embed_forward.1} parent=5 // pred_check
      _
    $region10: #{patch_embed_forward.1} parent=5 // pred_check_branch
      %132 = sbr.rel (%p129) target = $region12
    $region11: #{patch_embed_forward.1} parent=5 // pred_region
      %s133 = ssub.s32 %s9, 1
      // Predicated region
      $region13: #{patch_embed_forward.1} parent=11 // pred_check
        %p134 = pneg %p70
      $region14: #{patch_embed_forward.1} parent=11 // pred_check_branch
        %136 = sbr.rel (%p134) target = $region16
      $region15: #{patch_embed_forward.1} parent=11 // pred_region
        _
      $region16: #{patch_embed_forward.1} parent=11 // pred_fallthru
        _
      // Predicated region
      $region17: #{patch_embed_forward.1} parent=11 // pred_check
        %p137 = pneg %p91
      $region18: #{patch_embed_forward.1} parent=11 // pred_check_branch
        %139 = sbr.rel (%p137) target = $region20
      $region19: #{patch_embed_forward.1} parent=11 // pred_region
        _
      $region20: #{patch_embed_forward.1} parent=11 // pred_fallthru
        _
    $region12: #{patch_embed_forward.1} parent=5 // pred_fallthru
      _
    %p140 = scmp.lt.s32.totalorder %s9, 2
    // Predicated region
    $region21: #{patch_embed_forward.1} parent=5 // pred_check
      %p141 = pneg %p140
    $region22: #{patch_embed_forward.1} parent=5 // pred_check_branch
      %143 = sbr.rel (%p141) target = $region24
    $region23: #{patch_embed_forward.1} parent=5 // pred_region
      // Predicated region
      $region25: #{patch_embed_forward.1} parent=23 // pred_check
        %p144 = pneg %p43
      $region26: #{patch_embed_forward.1} parent=23 // pred_check_branch
        %146 = sbr.rel (%p144) target = $region28
      $region27: #{patch_embed_forward.1} parent=23 // pred_region
        %s147 = smul.u32 4, %s17
        %p148 = scmp.lt.s32.totalorder %s16, 1
        %s149 = scalar_select %p148, %s16, 1
        %p150 = scmp.lt.s32.totalorder %s147, 3
        %s151 = scalar_select %p150, %s147, 3
        %s152 = smul.addr %s151, 2
        %s153 = smul.addr %s149, 8
        %s154 = sadd.s32 %s152, %s153
        %s155 = smul.addr %s154, 4
        %s156 = scalar_lea.vmem %s0, %s155
        %s157 = smul.u32 4, %s17
      $region28: #{patch_embed_forward.1} parent=23 // pred_fallthru
        _
    $region24: #{patch_embed_forward.1} parent=5 // pred_fallthru
      _
    %p158 = scmp.le.s32.totalorder 1, %s9
    %p159 = scmp.lt.s32.totalorder %s9, 3
    %p160 = pnand %p158, %p159
    %p161 = pneg %p160
    // Predicated region
    $region29: #{patch_embed_forward.1} parent=5 // pred_check
      _
    $region30: #{patch_embed_forward.1} parent=5 // pred_check_branch
      %163 = sbr.rel (%p160) target = $region32
    $region31: #{patch_embed_forward.1} parent=5 // pred_region
      %s164 = ssub.s32 %s9, 1
      %s165 = smul.u32 4, %s19
      %p166 = scmp.lt.s32.totalorder %s18, 1
      %s167 = scalar_select %p166, %s18, 1
      %p168 = scmp.lt.s32.totalorder %s165, 3
      %s169 = scalar_select %p168, %s165, 3
      %s170 = smul.addr %s169, 2
      %s171 = smul.addr %s167, 8
      %s172 = sadd.s32 %s170, %s171
      %s173 = smul.addr %s172, 4
      %s174 = scalar_lea.vmem %s0, %s173
      %p175 = pneg %p49
      %p176 = pneg %p46
      %p177 = pneg %p70
      %p178 = pneg %p67
      %p179 = pneg %p91
      %p180 = pneg %p88
      %p181 = pneg %p119
      %p182 = pneg %p116
      %p183 = scmp.lt.s32.totalorder %s18, 1
      %s184 = scalar_select %p183, %s18, 1
      %p185 = scmp.lt.s32.totalorder %s19, 0
      %s186 = scalar_select %p185, %s19, 0
      %s187 = smul.addr %s184, 4
      %s188 = sadd.s32 %s186, %s187
      %s189 = smul.addr %s188, 8
      %s190 = scalar_lea.vmem %s3, %s189
      %s191 = smul.u32 4, %s19
      %p192 = scmp.lt.s32.totalorder %s18, 1
      %s193 = scalar_select %p192, %s18, 1
      %p194 = scmp.lt.s32.totalorder %s191, 3
      %s195 = scalar_select %p194, %s191, 3
      %s196 = smul.addr %s195, 2
      %s197 = smul.addr %s193, 8
      %s198 = sadd.s32 %s196, %s197
      %s199 = smul.addr %s198, 4
      %s200 = scalar_lea.vmem %s0, %s199
      %s201 = smul.u32 4, %s19
      %p202 = scmp.lt.s32.totalorder %s18, 1
      %s203 = scalar_select %p202, %s18, 1
      %p204 = scmp.lt.s32.totalorder %s19, 0
      %s205 = scalar_select %p204, %s19, 0
      %s206 = smul.addr %s203, 4
      %s207 = sadd.s32 %s205, %s206
      %s208 = smul.addr %s207, 8
      %s209 = scalar_lea.vmem %s3, %s208
      %v211 = vld [vmem:[%s1] sm:$0xff]
      %v212 = vld [vmem:[%s1 + $0x8] sm:$0xff]
      %v213 = vld [vmem:[%s1 + $0x10] sm:$0xff]
      %v214 = vld [vmem:[%s1 + $0x18] sm:$0xff]
      %v215 = vld [vmem:[%s200] sm:$0xff]
      %v216 = vld [vmem:[%s200 + $0x8] sm:$0xff]
      %v217 = vld [vmem:[%s200 + $0x10] sm:$0xff]
      %v218 = vld [vmem:[%s200 + $0x18] sm:$0xff]
      %v219 = vld [vmem:[%s2] sm:$0xff]
      %v220 = vld [vmem:[%s2 + $0x8] sm:$0xff]
      %v221 = vld [vmem:[%s2 + $0x10] sm:$0xff]
      %v222 = vld [vmem:[%s2 + $0x18] sm:$0xff]
      %224 = vset.pattern.permute.xlu0 0
      %225 = vperm.xlu0 %224, %v219
      %v226 = vpop.permute.xlu0 %225
      %229 = vset.pattern.permute.xlu0 0
      %230 = vperm.xlu0 %229, %v220
      %v231 = vpop.permute.xlu0 %230
      %234 = vset.pattern.permute.xlu0 0
      %235 = vperm.xlu0 %234, %v221
      %v236 = vpop.permute.xlu0 %235
      %239 = vset.pattern.permute.xlu0 0
      %240 = vperm.xlu0 %239, %v222
      %v241 = vpop.permute.xlu0 %240
      %v247 = vunpack.c.l.b16 %v211
      %v248 = vunpack.c.h.b16 %v211
      %v249 = vunpack.c.l.b16 %v212
      %v250 = vunpack.c.h.b16 %v212
      %v251 = vunpack.c.l.b16 %v213
      %v252 = vunpack.c.h.b16 %v213
      %v253 = vunpack.c.l.b16 %v214
      %v254 = vunpack.c.h.b16 %v214
      %v255 = vpack.c.b16 %v249, %v247
      %v256 = vpack.c.b16 %v250, %v248
      %v257 = vpack.c.b16 %v253, %v251
      %v258 = vpack.c.b16 %v254, %v252
      %v265 = vunpack.c.l.b16 %v215
      %v266 = vunpack.c.h.b16 %v215
      %v267 = vunpack.c.l.b16 %v216
      %v268 = vunpack.c.h.b16 %v216
      %v269 = vunpack.c.l.b16 %v217
      %v270 = vunpack.c.h.b16 %v217
      %v271 = vunpack.c.l.b16 %v218
      %v272 = vunpack.c.h.b16 %v218
      %v273 = vpack.c.b16 %v267, %v265
      %v274 = vpack.c.b16 %v268, %v266
      %v275 = vpack.c.b16 %v271, %v269
      %v276 = vpack.c.b16 %v272, %v270
      %vm279 = vcmask 523264
      %v281 = vsel %vm279, %v256, 0
      %v284 = vsel %vm279, %v258, 0
      %v287 = vsel %vm279, %v274, 0
      %v290 = vsel %vm279, %v276, 0
      %292 = vmatpush.bf16.xpose.msra.mxu0 0
      %293 = vmatpush.bf16.xpose.msra.mxu0 0
      %294 = vmatpush.bf16.xpose.msra.mxu0 0
      %295 = vmatpush.bf16.xpose.msra.mxu0 0
      %296 = vmatpush.bf16.xpose.msra.mxu0 0
      %297 = vmatpush.bf16.xpose.msra.mxu0 0
      %298 = vmatpush.bf16.xpose.msra.mxu0 %v275
      %299 = vmatpush.bf16.xpose.msra.mxu0 %v273
      %300 = vmatmul.bf16.gmra.mxu0 %v255
      %v301 = vpop.f32.mrf.mxu0
      %v302 = vadd.f32 %v226, %v301
      %v303 = vpop.f32.mrf.mxu0
      %v304 = vadd.f32 %v231, %v303
      %305 = vmatmul.bf16.gmra.mxu0 %v257
      %v306 = vpop.f32.mrf.mxu0
      %v307 = vadd.f32 %v236, %v306
      %v308 = vpop.f32.mrf.mxu0
      %v309 = vadd.f32 %v241, %v308
      %310 = vdwg.mxu0
      %311 = vmatpush.bf16.xpose.msra.mxu0 0
      %312 = vmatpush.bf16.xpose.msra.mxu0 0
      %313 = vmatpush.bf16.xpose.msra.mxu0 0
      %314 = vmatpush.bf16.xpose.msra.mxu0 0
      %315 = vmatpush.bf16.xpose.msra.mxu0 0
      %316 = vmatpush.bf16.xpose.msra.mxu0 0
      %317 = vmatpush.bf16.xpose.msra.mxu0 %v290
      %318 = vmatpush.bf16.xpose.msra.mxu0 %v287
      %319 = vmatmul.bf16.gmra.mxu0 %v281
      %v320 = vpop.f32.mrf.mxu0
      %v321 = vadd.f32 %v302, %v320
      %v322 = vpop.f32.mrf.mxu0
      %v323 = vadd.f32 %v304, %v322
      %324 = vmatmul.bf16.gmra.mxu0 %v284
      %v325 = vpop.f32.mrf.mxu0
      %v326 = vadd.f32 %v307, %v325
      %v327 = vpop.f32.mrf.mxu0
      %v328 = vadd.f32 %v309, %v327
      %329 = vdwg.mxu0
      %vm330 = vcmask 261120
      %331 = vst.msk [vmem:[%s209] sm:$0xff] %vm330, %v321
      %332 = vst.msk [vmem:[%s209 + $0x8] sm:$0xff] %vm330, %v323
      %333 = vst.msk [vmem:[%s209 + $0x10] sm:$0xff] %vm330, %v326
      %334 = vst.msk [vmem:[%s209 + $0x18] sm:$0xff] %vm330, %v328
      %p335 = scmp.lt.s32.totalorder %s18, 1
      %s336 = scalar_select %p335, %s18, 1
      %p337 = scmp.lt.s32.totalorder %s19, 0
      %s338 = scalar_select %p337, %s19, 0
      %s339 = smul.addr %s336, 4
      %s340 = sadd.s32 %s338, %s339
      %s341 = smul.addr %s340, 8
      %s342 = scalar_lea.vmem %s3, %s341
      // Predicated region
      $region33: #{patch_embed_forward.1} parent=31 // pred_check
        %p343 = pneg %p116
      $region34: #{patch_embed_forward.1} parent=31 // pred_check_branch
        %345 = sbr.rel (%p343) target = $region36
      $region35: #{patch_embed_forward.1} parent=31 // pred_region
        _
      $region36: #{patch_embed_forward.1} parent=31 // pred_fallthru
        _
    $region32: #{patch_embed_forward.1} parent=5 // pred_fallthru
      _
    %p346 = scmp.le.s32.totalorder 2, %s9
    // Predicated region
    $region37: #{patch_embed_forward.1} parent=5 // pred_check
      %p347 = pneg %p346
    $region38: #{patch_embed_forward.1} parent=5 // pred_check_branch
      %349 = sbr.rel (%p347) target = $region40
    $region39: #{patch_embed_forward.1} parent=5 // pred_region
      %s350 = ssub.s32 %s9, 2
      // Predicated region
      $region41: #{patch_embed_forward.1} parent=39 // pred_check
        %p351 = pneg %p122
      $region42: #{patch_embed_forward.1} parent=39 // pred_check_branch
        %353 = sbr.rel (%p351) target = $region44
      $region43: #{patch_embed_forward.1} parent=39 // pred_region
        %p354 = scmp.lt.s32.totalorder %s20, 1
        %s355 = scalar_select %p354, %s20, 1
        %p356 = scmp.lt.s32.totalorder %s21, 0
        %s357 = scalar_select %p356, %s21, 0
        %s358 = smul.addr %s355, 4
        %s359 = sadd.s32 %s357, %s358
        %s360 = smul.addr %s359, 8
        %s361 = scalar_lea.vmem %s3, %s360
      $region44: #{patch_embed_forward.1} parent=39 // pred_fallthru
        _
    $region40: #{patch_embed_forward.1} parent=5 // pred_fallthru
      _
  $region6: #{patch_embed_forward.1} parent=0 // loop_footer
    %s13 = sadd.s32 1, %s9
  $region7: #{patch_embed_forward.1} parent=0 // loop_footer_branch
    %8 = sbr.rel target = $region3
  $region8: #{patch_embed_forward.1} parent=0 // loop_exit
    _

</llo_original>
